<compile_context>
chip_gen: v7x
topology: tpu7x:2x2x1
jax: 0.10.0
libtpu: 0.0.40
codegen_flags: <defaults>
</compile_context>

<pallas_src>
import numpy as np
import jax
import jax.numpy as jnp
from jax.experimental import pallas as pl
from jax.experimental.pallas import tpu as pltpu

_LANE = 128
_C_IN = 5
_MAX_BATCH_FOLD = 8          # static unroll bound inside the kernel


def _branch_kernel(x_ref, w_ref, b_ref, o_ref):
    # x_ref: (Bt, 5, TS)   w_ref: (width, 5)   b_ref: (width, 1)   o_ref: (Bt, width, TS)
    w = w_ref[...]
    b = b_ref[...]
    bt, c_in, _ = x_ref.shape
    for bi in range(bt):                          # static unroll (Bt <= _MAX_BATCH_FOLD)
        x = x_ref[bi]                             # (5, TS)
        # K=5 contraction as unrolled VPU multiply-adds (exact f32; MXU stays idle).
        acc = w[:, 0:1] * x[0:1, :]
        for c in range(1, c_in):
            acc = acc + w[:, c:c + 1] * x[c:c + 1, :]
        o_ref[bi] = (acc + b).astype(o_ref.dtype)


def _round_down_lane(n):
    return (n // _LANE) * _LANE


def _round_up_lane(n):
    return ((n + _LANE - 1) // _LANE) * _LANE


def _block_budget_bytes():
    """Budget for the double-buffered in+out blocks of one grid step."""
    budget = 24 * 1024 * 1024       # safe on v5e/v6e (128 MiB VMEM) and v7x (64 MiB)
    try:                            # generation-aware clamp: stay well inside physical VMEM
        vmem = int(pltpu.get_tpu_info().vmem_capacity_bytes)
        budget = min(budget, (2 * vmem) // 5)
    except Exception:
        pass
    return max(budget, 4 * 1024 * 1024)


def _pick_tiles(B, S, width):
    """Choose (Bt, TS): large lane-dense blocks within the VMEM budget, batch folding
    for tiny spatial extents, and >= 2 grid steps whenever possible (v7x has 2 TCs)."""
    budget = _block_budget_bytes()
    bytes_per_col = 2 * (_C_IN + width) * 4          # double-buffered f32 in + f32 out
    ts = max(_LANE, _round_down_lane(budget // bytes_per_col))
    bt = 1
    if S <= ts:
        ts = S                                        # one block covers the full extent
        per_batch = bytes_per_col * S
        bt = int(min(B, _MAX_BATCH_FOLD, max(1, budget // max(per_batch, 1))))
    n_b = pl.cdiv(B, bt)
    n_s = pl.cdiv(S, ts)
    if n_b * n_s < 2:                                 # keep both v7x TensorCores busy
        if B >= 2:
            bt = (B + 1) // 2
        elif S >= 2 * _LANE:
            ts = _round_up_lane(pl.cdiv(S, 2))
    return bt, ts


@jax.jit
def branch_net(x, weight, bias):
    """x: (B, 5, H, W) f32.  weight: (width, 5) (PyTorch Linear layout).  bias: (width,).

    Returns (B, width, W+2, H), identical to the PyTorch forward."""
    B, C, H, W = x.shape
    assert C == _C_IN, "BranchNet expects 5 input channels"
    width = weight.shape[0]
    Wp = W + 2
    S = Wp * H

    # Wrapper copy over the *small* 5-channel input only: replicate-pad along W,
    # swap (H, W) -> (W, H), flatten spatial.  Even if XLA does not fully fuse the
    # pad/transpose, this is only a few % of total (output-dominated) HBM traffic.
    xp = jnp.pad(x, ((0, 0), (0, 0), (0, 0), (1, 1)), mode="edge")   # (B, 5, H, Wp)
    x_s = jnp.transpose(xp, (0, 1, 3, 2)).reshape(B, C, S)           # (B, 5, Wp*H)

    b2 = bias.reshape(width, 1)

    Bt, TS = _pick_tiles(B, S, width)
    n_b = pl.cdiv(B, Bt)
    n_s = pl.cdiv(S, TS)

    working_set = 2 * Bt * (C + width) * TS * 4 + 2 * width * (C + 1) * 4
    vmem_limit = int(min(48 * 1024 * 1024,
                         max(32 * 1024 * 1024, working_set + 8 * 1024 * 1024)))

    out = pl.pallas_call(
        _branch_kernel,
        out_shape=jax.ShapeDtypeStruct((B, width, S), x.dtype),
        grid_spec=pltpu.PrefetchScalarGridSpec(
            num_scalar_prefetch=0,
            grid=(n_b, n_s),
            in_specs=[
                pl.BlockSpec((Bt, C, TS), lambda b, s: (b, 0, s)),
                pl.BlockSpec((width, C), lambda b, s: (0, 0)),
                pl.BlockSpec((width, 1), lambda b, s: (0, 0)),
            ],
            out_specs=pl.BlockSpec((Bt, width, TS), lambda b, s: (b, 0, s)),
        ),
        compiler_params=pltpu.CompilerParams(
            dimension_semantics=("parallel", "parallel"),
            vmem_limit_bytes=vmem_limit),
    )(x_s, weight, b2)

    # Free row-major split of the trailing dim: (B, width, Wp*H) -> (B, width, Wp, H).
    return out.reshape(B, width, Wp, H)


def branch_net_ref(x, weight, bias):
    """NumPy reference mirroring the PyTorch forward exactly (pure f32 math, no TPU
    matmul precision quirks)."""
    x = np.asarray(x)
    weight = np.asarray(weight)
    bias = np.asarray(bias)
    xp = np.pad(x, ((0, 0), (0, 0), (0, 0), (1, 1)), mode="edge")    # (B, 5, H, W+2)
    xt = np.transpose(xp, (0, 3, 2, 1))                              # (B, W+2, H, 5)
    y = xt @ weight.T + bias                                         # (B, W+2, H, width)
    return np.transpose(y, (0, 3, 1, 2))                             # (B, width, W+2, H)


if __name__ == "__main__":
    key = jax.random.PRNGKey(0)
    k_x, k_w, k_b = jax.random.split(key, 3)

    B, C, H, W = 2, 5, 16, 16
    width = 32

    x = jax.random.normal(k_x, (B, C, H, W), dtype=jnp.float32)
    # Deterministic synthetic Linear(5, width) parameters (PyTorch layout: (out, in)).
    weight = jax.random.normal(k_w, (width, C), dtype=jnp.float32) * 0.1
    bias = jax.random.normal(k_b, (width,), dtype=jnp.float32) * 0.1

    out = jax.block_until_ready(branch_net(x, weight, bias))
    ref = branch_net_ref(x, weight, bias)

    assert out.shape == (B, width, W + 2, H), out.shape
    assert jnp.allclose(out, jnp.asarray(ref), atol=1e-5, rtol=1e-5), \
        float(jnp.max(jnp.abs(out - jnp.asarray(ref))))

    print("KERNEL_OK")
</pallas_src>

<mosaic_0001>
module attributes {stable_mosaic.version = 11 : i64} {
  func.func @_branch_kernel(%arg0: i32, %arg1: i32, %arg2: memref<1x5x288xf32, #tpu.memory_space<vmem>>, %arg3: memref<32x5xf32, #tpu.memory_space<vmem>>, %arg4: memref<32x1xf32, #tpu.memory_space<vmem>>, %arg5: memref<1x32x288xf32, #tpu.memory_space<vmem>>) attributes {dimension_semantics = [#tpu.dimension_semantics<parallel>, #tpu.dimension_semantics<parallel>], iteration_bounds = array<i64: 2, 1>, scalar_prefetch = 0 : i64, scratch_operands = 0 : i64, tpu.core_type = #tpu.core_type<tc>, window_params = [{transform_indices = @transform_0, window_bounds = array<i64: 1, 5, 288>}, {pipeline_mode = #tpu.pipeline_mode<synchronous>, transform_indices = @transform_1, window_bounds = array<i64: 32, 5>}, {pipeline_mode = #tpu.pipeline_mode<synchronous>, transform_indices = @transform_2, window_bounds = array<i64: 32, 1>}, {transform_indices = @transform_3, window_bounds = array<i64: 1, 32, 288>}]} {
    %c0 = arith.constant 0 : index
    %c0_0 = arith.constant 0 : index
    %0 = vector.load %arg3[%c0, %c0_0] : memref<32x5xf32, #tpu.memory_space<vmem>>, vector<32x5xf32>
    %c0_1 = arith.constant 0 : index
    %c0_2 = arith.constant 0 : index
    %1 = vector.load %arg4[%c0_1, %c0_2] : memref<32x1xf32, #tpu.memory_space<vmem>>, vector<32x1xf32>
    %c0_3 = arith.constant 0 : index
    %c0_4 = arith.constant 0 : index
    %c0_5 = arith.constant 0 : index
    %2 = vector.load %arg2[%c0_3, %c0_4, %c0_5] : memref<1x5x288xf32, #tpu.memory_space<vmem>>, vector<1x5x288xf32>
    %3 = vector.shape_cast %2 : vector<1x5x288xf32> to vector<5x288xf32>
    %4 = vector.extract_strided_slice %0 {offsets = [0, 0], sizes = [32, 1], strides = [1, 1]} : vector<32x5xf32> to vector<32x1xf32>
    %5 = vector.extract_strided_slice %3 {offsets = [0, 0], sizes = [1, 288], strides = [1, 1]} : vector<5x288xf32> to vector<1x288xf32>
    %6 = vector.broadcast %4 : vector<32x1xf32> to vector<32x288xf32>
    %7 = vector.broadcast %5 : vector<1x288xf32> to vector<32x288xf32>
    %8 = arith.mulf %6, %7 : vector<32x288xf32>
    %9 = vector.extract_strided_slice %0 {offsets = [0, 1], sizes = [32, 1], strides = [1, 1]} : vector<32x5xf32> to vector<32x1xf32>
    %10 = vector.extract_strided_slice %3 {offsets = [1, 0], sizes = [1, 288], strides = [1, 1]} : vector<5x288xf32> to vector<1x288xf32>
    %11 = vector.broadcast %9 : vector<32x1xf32> to vector<32x288xf32>
    %12 = vector.broadcast %10 : vector<1x288xf32> to vector<32x288xf32>
    %13 = arith.mulf %11, %12 : vector<32x288xf32>
    %14 = arith.addf %8, %13 : vector<32x288xf32>
    %15 = vector.extract_strided_slice %0 {offsets = [0, 2], sizes = [32, 1], strides = [1, 1]} : vector<32x5xf32> to vector<32x1xf32>
    %16 = vector.extract_strided_slice %3 {offsets = [2, 0], sizes = [1, 288], strides = [1, 1]} : vector<5x288xf32> to vector<1x288xf32>
    %17 = vector.broadcast %15 : vector<32x1xf32> to vector<32x288xf32>
    %18 = vector.broadcast %16 : vector<1x288xf32> to vector<32x288xf32>
    %19 = arith.mulf %17, %18 : vector<32x288xf32>
    %20 = arith.addf %14, %19 : vector<32x288xf32>
    %21 = vector.extract_strided_slice %0 {offsets = [0, 3], sizes = [32, 1], strides = [1, 1]} : vector<32x5xf32> to vector<32x1xf32>
    %22 = vector.extract_strided_slice %3 {offsets = [3, 0], sizes = [1, 288], strides = [1, 1]} : vector<5x288xf32> to vector<1x288xf32>
    %23 = vector.broadcast %21 : vector<32x1xf32> to vector<32x288xf32>
    %24 = vector.broadcast %22 : vector<1x288xf32> to vector<32x288xf32>
    %25 = arith.mulf %23, %24 : vector<32x288xf32>
    %26 = arith.addf %20, %25 : vector<32x288xf32>
    %27 = vector.extract_strided_slice %0 {offsets = [0, 4], sizes = [32, 1], strides = [1, 1]} : vector<32x5xf32> to vector<32x1xf32>
    %28 = vector.extract_strided_slice %3 {offsets = [4, 0], sizes = [1, 288], strides = [1, 1]} : vector<5x288xf32> to vector<1x288xf32>
    %29 = vector.broadcast %27 : vector<32x1xf32> to vector<32x288xf32>
    %30 = vector.broadcast %28 : vector<1x288xf32> to vector<32x288xf32>
    %31 = arith.mulf %29, %30 : vector<32x288xf32>
    %32 = arith.addf %26, %31 : vector<32x288xf32>
    %33 = vector.broadcast %1 : vector<32x1xf32> to vector<32x288xf32>
    %34 = arith.addf %32, %33 : vector<32x288xf32>
    %c0_6 = arith.constant 0 : index
    %c0_7 = arith.constant 0 : index
    %c0_8 = arith.constant 0 : index
    %35 = vector.load %arg5[%c0_6, %c0_7, %c0_8] : memref<1x32x288xf32, #tpu.memory_space<vmem>>, vector<1x32x288xf32>
    %36 = vector.shape_cast %35 : vector<1x32x288xf32> to vector<32x288xf32>
    %37 = vector.shape_cast %34 : vector<32x288xf32> to vector<1x32x288xf32>
    tpu.vector_store %arg5[%c0_6, %c0_7, %c0_8], %37 {strides = array<i32>} : memref<1x32x288xf32, #tpu.memory_space<vmem>>, vector<1x32x288xf32>,
    return
  }
  func.func @transform_0(%arg0: i32, %arg1: i32) -> (i32, i32, i32) {
    %c0_i32 = arith.constant 0 : i32
    %c0_i32_0 = arith.constant 0 : i32
    return %arg0, %c0_i32, %arg1 : i32, i32, i32
  }
  func.func @transform_1(%arg0: i32, %arg1: i32) -> (i32, i32) {
    %c0_i32 = arith.constant 0 : i32
    %c0_i32_0 = arith.constant 0 : i32
    %c0_i32_1 = arith.constant 0 : i32
    return %c0_i32, %c0_i32_0 : i32, i32
  }
  func.func @transform_2(%arg0: i32, %arg1: i32) -> (i32, i32) {
    %c0_i32 = arith.constant 0 : i32
    %c0_i32_0 = arith.constant 0 : i32
    %c0_i32_1 = arith.constant 0 : i32
    return %c0_i32, %c0_i32_0 : i32, i32
  }
  func.func @transform_3(%arg0: i32, %arg1: i32) -> (i32, i32, i32) {
    %c0_i32 = arith.constant 0 : i32
    %c0_i32_0 = arith.constant 0 : i32
    return %arg0, %c0_i32, %arg1 : i32, i32, i32
  }
}

</mosaic_0001>

<llo_original>
// kernel: branch_net.1
$region0: #{branch_net.1}
  #allocation0 [shape = 'u32[]', space=smem, size = 0x4, offset = 0x4, fixed_abs, tag = 'smem constant byte address 0x4 - core index']
  #allocation1 [shape = 'u32[144,128]{1,0:T(1,128)}', space=vmem, size = 0x12000, scoped, tag = 'internal scratch']
  %s0 = inlined_call_operand.vmem [shape: f32[2,5,288], index: 0, kind: input, shape index: {}]
  %s1 = inlined_call_operand.vmem [shape: f32[32,5], index: 1, kind: input, shape index: {}]
  %s2 = inlined_call_operand.vmem [shape: f32[32,1], index: 2, kind: input, shape index: {}]
  %s3 = inlined_call_operand.vmem [shape: f32[2,32,288], index: 3, kind: output, shape index: {}]
  %s4 = sld [smem:[#allocation0]]
  $region45: #{branch_net.1} parent=0
    _
  %s6 = ssub.s32 1, %s4
  %s7 = scalar_select 0, %s6, %s4
  loop: start=0, step=1, limit=4
  $region2: #{branch_net.1} parent=0 // loop_pre_header
    _
  $region3: #{branch_net.1} parent=0 // loop_header
    %s9 = sphi 0, %s13
    %p10 = scmp.ge.s32.totalorder %s9, 4
    %s16 = sphi 0, %s28
    %s17 = sphi 0, %s24
    %s18 = sphi 0, %s16
    %s19 = sphi 0, %s17
    %s20 = sphi 0, %s18
    %s21 = sphi 0, %s19
    %s33 = sphi 0, %s35
    %s36 = sphi 0, %s33
    %s37 = sphi 0, %s36
    %s53 = sphi 0, %s37
    %s57 = sphi 0, %s57
    %s59 = sphi 0, %s57
    %s60 = sphi 0, %s59
    %s74 = sphi 0, %s60
    %s78 = sphi 0, %s78
    %s80 = sphi 0, %s78
    %s81 = sphi 0, %s80
    %s95 = sphi 0, %s81
    %s103 = sphi 0, %s105
    %s106 = sphi 0, %s103
    %s107 = sphi 0, %s106
    %s123 = sphi 0, %s107
  $region4: #{branch_net.1} parent=0 // loop_header_branch
    %12 = sbr.rel (%p10) target = $region8
  $region5: #{branch_net.1} parent=0 // loop_body
    %s14 = ssub.s32 %s9, 1
    %s15 = ssub.s32 %s9, 2
    %s22 = sadd.s32 1, %s17
    %p23 = scmp.ge.s32.totalorder %s22, 1
    %s24 = scalar_select %p23, 0, %s22
    %s25 = sadd.s32 1, %s16
    %s26 = scalar_select %p23, %s25, %s16
    %p27 = scmp.ge.s32.totalorder %s26, 2
    %s28 = scalar_select %p27, 0, %s26
    %s29 = ssub.s32 %s16, %s28
    %s30 = ssub.s32 %s17, %s24
    %s31 = sor.u32 %s29, %s30
    %p32 = scmp.eq.s32.totalorder %s31, 0
    %s34 = sadd.s32 %s33, 1
    %s35 = scalar_select %p32, %s33, %s34
    %p38 = pneg %p32
    %p39 = scmp.eq.s32.totalorder %s9, 1
    %p40 = por %p38, %p39
    %p41 = scmp.ne.s32.totalorder %s33, %s36
    %p42 = scmp.eq.s32.totalorder %s9, 0
    %p43 = por %p41, %p42
    %p44 = scmp.ne.s32.totalorder %s33, %s36
    %p45 = scmp.eq.s32.totalorder %s14, 1
    %p46 = por %p44, %p45
    %p47 = scmp.ne.s32.totalorder %s36, %s37
    %p48 = scmp.eq.s32.totalorder %s14, 0
    %p49 = por %p47, %p48
    %p50 = scmp.ne.s32.totalorder %s36, %s37
    %p51 = scmp.eq.s32.totalorder %s15, 1
    %p52 = por %p50, %p51
    %p54 = scmp.ne.s32.totalorder %s37, %s53
    %p55 = scmp.eq.s32.totalorder %s15, 0
    %p56 = por %p54, %p55
    %s58 = sadd.s32 %s57, 1
    %p61 = scmp.eq.s32.totalorder %s9, 1
    %p62 = scmp.ne.s32.totalorder %s57, %s59
    %p63 = scmp.eq.s32.totalorder %s9, 0
    %p64 = por %p62, %p63
    %p65 = scmp.ne.s32.totalorder %s57, %s59
    %p66 = scmp.eq.s32.totalorder %s14, 1
    %p67 = por %p65, %p66
    %p68 = scmp.ne.s32.totalorder %s59, %s60
    %p69 = scmp.eq.s32.totalorder %s14, 0
    %p70 = por %p68, %p69
    %p71 = scmp.ne.s32.totalorder %s59, %s60
    %p72 = scmp.eq.s32.totalorder %s15, 1
    %p73 = por %p71, %p72
    %p75 = scmp.ne.s32.totalorder %s60, %s74
    %p76 = scmp.eq.s32.totalorder %s15, 0
    %p77 = por %p75, %p76
    %s79 = sadd.s32 %s78, 1
    %p82 = scmp.eq.s32.totalorder %s9, 1
    %p83 = scmp.ne.s32.totalorder %s78, %s80
    %p84 = scmp.eq.s32.totalorder %s9, 0
    %p85 = por %p83, %p84
    %p86 = scmp.ne.s32.totalorder %s78, %s80
    %p87 = scmp.eq.s32.totalorder %s14, 1
    %p88 = por %p86, %p87
    %p89 = scmp.ne.s32.totalorder %s80, %s81
    %p90 = scmp.eq.s32.totalorder %s14, 0
    %p91 = por %p89, %p90
    %p92 = scmp.ne.s32.totalorder %s80, %s81
    %p93 = scmp.eq.s32.totalorder %s15, 1
    %p94 = por %p92, %p93
    %p96 = scmp.ne.s32.totalorder %s81, %s95
    %p97 = scmp.eq.s32.totalorder %s15, 0
    %p98 = por %p96, %p97
    %s99 = ssub.s32 %s16, %s28
    %s100 = ssub.s32 %s17, %s24
    %s101 = sor.u32 %s99, %s100
    %p102 = scmp.eq.s32.totalorder %s101, 0
    %s104 = sadd.s32 %s103, 1
    %s105 = scalar_select %p102, %s103, %s104
    %p108 = pneg %p102
    %p109 = scmp.eq.s32.totalorder %s9, 1
    %p110 = por %p108, %p109
    %p111 = scmp.ne.s32.totalorder %s103, %s106
    %p112 = scmp.eq.s32.totalorder %s9, 0
    %p113 = por %p111, %p112
    %p114 = scmp.ne.s32.totalorder %s103, %s106
    %p115 = scmp.eq.s32.totalorder %s14, 1
    %p116 = por %p114, %p115
    %p117 = scmp.ne.s32.totalorder %s106, %s107
    %p118 = scmp.eq.s32.totalorder %s14, 0
    %p119 = por %p117, %p118
    %p120 = scmp.ne.s32.totalorder %s106, %s107
    %p121 = scmp.eq.s32.totalorder %s15, 1
    %p122 = por %p120, %p121
    %p124 = scmp.ne.s32.totalorder %s107, %s123
    %p125 = scmp.eq.s32.totalorder %s15, 0
    %p126 = por %p124, %p125
    %p127 = scmp.le.s32.totalorder 1, %s9
    %p128 = scmp.lt.s32.totalorder %s9, 3
    %p129 = pnand %p127, %p128
    %p130 = pneg %p129
    // Predicated region
    $region9: #{branch_net.1} parent=5 // pred_check
      _
    $region10: #{branch_net.1} parent=5 // pred_check_branch
      %132 = sbr.rel (%p129) target = $region12
    $region11: #{branch_net.1} parent=5 // pred_region
      %s133 = ssub.s32 %s9, 1
      // Predicated region
      $region13: #{branch_net.1} parent=11 // pred_check
        %p134 = pneg %p70
      $region14: #{branch_net.1} parent=11 // pred_check_branch
        %136 = sbr.rel (%p134) target = $region16
      $region15: #{branch_net.1} parent=11 // pred_region
        _
      $region16: #{branch_net.1} parent=11 // pred_fallthru
        _
      // Predicated region
      $region17: #{branch_net.1} parent=11 // pred_check
        %p137 = pneg %p91
      $region18: #{branch_net.1} parent=11 // pred_check_branch
        %139 = sbr.rel (%p137) target = $region20
      $region19: #{branch_net.1} parent=11 // pred_region
        _
      $region20: #{branch_net.1} parent=11 // pred_fallthru
        _
    $region12: #{branch_net.1} parent=5 // pred_fallthru
      _
    %p140 = scmp.lt.s32.totalorder %s9, 2
    // Predicated region
    $region21: #{branch_net.1} parent=5 // pred_check
      %p141 = pneg %p140
    $region22: #{branch_net.1} parent=5 // pred_check_branch
      %143 = sbr.rel (%p141) target = $region24
    $region23: #{branch_net.1} parent=5 // pred_region
      // Predicated region
      $region25: #{branch_net.1} parent=23 // pred_check
        %p144 = pneg %p43
      $region26: #{branch_net.1} parent=23 // pred_check_branch
        %146 = sbr.rel (%p144) target = $region28
      $region27: #{branch_net.1} parent=23 // pred_region
        %s147 = smul.u32 3, %s17
        %p148 = scmp.lt.s32.totalorder %s16, 1
        %s149 = scalar_select %p148, %s16, 1
        %p150 = scmp.lt.s32.totalorder %s147, 2
        %s151 = scalar_select %p150, %s147, 2
        %s152 = smul.addr %s149, 3
        %s153 = sadd.s32 %s151, %s152
        %s154 = smul.addr %s153, 8
        %s155 = scalar_lea.vmem %s0, %s154
        %s156 = smul.u32 3, %s17
      $region28: #{branch_net.1} parent=23 // pred_fallthru
        _
    $region24: #{branch_net.1} parent=5 // pred_fallthru
      _
    %p157 = scmp.le.s32.totalorder 1, %s9
    %p158 = scmp.lt.s32.totalorder %s9, 3
    %p159 = pnand %p157, %p158
    %p160 = pneg %p159
    // Predicated region
    $region29: #{branch_net.1} parent=5 // pred_check
      _
    $region30: #{branch_net.1} parent=5 // pred_check_branch
      %162 = sbr.rel (%p159) target = $region32
    $region31: #{branch_net.1} parent=5 // pred_region
      %s163 = ssub.s32 %s9, 1
      %s164 = smul.u32 3, %s19
      %p165 = scmp.lt.s32.totalorder %s18, 1
      %s166 = scalar_select %p165, %s18, 1
      %p167 = scmp.lt.s32.totalorder %s164, 2
      %s168 = scalar_select %p167, %s164, 2
      %s169 = smul.addr %s166, 3
      %s170 = sadd.s32 %s168, %s169
      %s171 = smul.addr %s170, 8
      %s172 = scalar_lea.vmem %s0, %s171
      %p173 = pneg %p49
      %p174 = pneg %p46
      %p175 = pneg %p70
      %p176 = pneg %p67
      %p177 = pneg %p91
      %p178 = pneg %p88
      %p179 = pneg %p119
      %p180 = pneg %p116
      %s181 = smul.u32 3, %s19
      %p182 = scmp.lt.s32.totalorder %s18, 1
      %s183 = scalar_select %p182, %s18, 1
      %p184 = scmp.lt.s32.totalorder %s181, 2
      %s185 = scalar_select %p184, %s181, 2
      %s186 = smul.addr %s183, 12
      %s187 = sadd.s32 %s185, %s186
      %s188 = smul.addr %s187, 8
      %s189 = scalar_lea.vmem %s3, %s188
      %s190 = smul.u32 3, %s19
      %p191 = scmp.lt.s32.totalorder %s18, 1
      %s192 = scalar_select %p191, %s18, 1
      %p193 = scmp.lt.s32.totalorder %s190, 2
      %s194 = scalar_select %p193, %s190, 2
      %s195 = smul.addr %s192, 3
      %s196 = sadd.s32 %s194, %s195
      %s197 = smul.addr %s196, 8
      %s198 = scalar_lea.vmem %s0, %s197
      %s199 = smul.u32 3, %s19
      %s200 = smul.u32 3, %s19
      %p201 = scmp.lt.s32.totalorder %s18, 1
      %s202 = scalar_select %p201, %s18, 1
      %p203 = scmp.lt.s32.totalorder %s200, 2
      %s204 = scalar_select %p203, %s200, 2
      %s205 = smul.addr %s202, 12
      %s206 = sadd.s32 %s204, %s205
      %s207 = smul.addr %s206, 8
      %s208 = scalar_lea.vmem %s3, %s207
      %s209 = smul.u32 3, %s19
      %v210 = vld [vmem:[%s1] sm:$0xff]
      %v211 = vld [vmem:[%s1 + $0x8] sm:$0xff]
      %v212 = vld [vmem:[%s1 + $0x10] sm:$0xff]
      %v213 = vld [vmem:[%s1 + $0x18] sm:$0xff]
      %v214 = vld [vmem:[%s2] sm:$0xff]
      %v215 = vld [vmem:[%s2 + $0x8] sm:$0xff]
      %v216 = vld [vmem:[%s2 + $0x10] sm:$0xff]
      %v217 = vld [vmem:[%s2 + $0x18] sm:$0xff]
      %v218 = vld [vmem:[%s198] sm:$0x1f]
      %v219 = vld [vmem:[%s198 + $0x8] sm:$0x1f]
      %v220 = vld [vmem:[%s198 + $0x10] sm:$0x1f]
      %222 = vset.pattern.permute.xlu0 0
      %223 = vperm.xlu0 %222, %v210
      %v224 = vpop.permute.xlu0 %223
      %227 = vset.pattern.permute.xlu0 0
      %228 = vperm.xlu0 %227, %v211
      %v229 = vpop.permute.xlu0 %228
      %232 = vset.pattern.permute.xlu0 0
      %233 = vperm.xlu0 %232, %v212
      %v234 = vpop.permute.xlu0 %233
      %237 = vset.pattern.permute.xlu0 0
      %238 = vperm.xlu0 %237, %v213
      %v239 = vpop.permute.xlu0 %238
      %v241 = vlaneseq
      %v242 = vshrl.u32 %v241, 7
      %v243 = vsub.s32 0, %v242
      %v244 = vrot.slane %v218, %v243
      %v245 = vlaneseq
      %v246 = vshrl.u32 %v245, 7
      %v247 = vsub.s32 0, %v246
      %v248 = vrot.slane %v219, %v247
      %v249 = vlaneseq
      %v250 = vshrl.u32 %v249, 7
      %v251 = vsub.s32 0, %v250
      %v252 = vrot.slane %v220, %v251
      %v253 = vmul.f32 %v224, %v244
      %v254 = vmul.f32 %v224, %v248
      %v255 = vmul.f32 %v224, %v252
      %v256 = vmul.f32 %v229, %v244
      %v257 = vmul.f32 %v229, %v248
      %v258 = vmul.f32 %v229, %v252
      %v259 = vmul.f32 %v234, %v244
      %v260 = vmul.f32 %v234, %v248
      %v261 = vmul.f32 %v234, %v252
      %v262 = vmul.f32 %v239, %v244
      %v263 = vmul.f32 %v239, %v248
      %v264 = vmul.f32 %v239, %v252
      %265 = vset.pattern.permute.xlu0 1
      %266 = vperm.xlu0 %265, %v210
      %v267 = vpop.permute.xlu0 %266
      %269 = vset.pattern.permute.xlu0 1
      %270 = vperm.xlu0 %269, %v211
      %v271 = vpop.permute.xlu0 %270
      %273 = vset.pattern.permute.xlu0 1
      %274 = vperm.xlu0 %273, %v212
      %v275 = vpop.permute.xlu0 %274
      %277 = vset.pattern.permute.xlu0 1
      %278 = vperm.xlu0 %277, %v213
      %v279 = vpop.permute.xlu0 %278
      %v281 = vlaneseq
      %v282 = vshrl.u32 %v281, 7
      %v283 = vsub.s32 1, %v282
      %v284 = vrot.slane %v218, %v283
      %v285 = vlaneseq
      %v286 = vshrl.u32 %v285, 7
      %v287 = vsub.s32 1, %v286
      %v288 = vrot.slane %v219, %v287
      %v289 = vlaneseq
      %v290 = vshrl.u32 %v289, 7
      %v291 = vsub.s32 1, %v290
      %v292 = vrot.slane %v220, %v291
      %v293 = vmul.f32 %v267, %v284
      %v294 = vmul.f32 %v267, %v288
      %v295 = vmul.f32 %v267, %v292
      %v296 = vmul.f32 %v271, %v284
      %v297 = vmul.f32 %v271, %v288
      %v298 = vmul.f32 %v271, %v292
      %v299 = vmul.f32 %v275, %v284
      %v300 = vmul.f32 %v275, %v288
      %v301 = vmul.f32 %v275, %v292
      %v302 = vmul.f32 %v279, %v284
      %v303 = vmul.f32 %v279, %v288
      %v304 = vmul.f32 %v279, %v292
      %v305 = vadd.f32 %v253, %v293
      %v306 = vadd.f32 %v254, %v294
      %v307 = vadd.f32 %v255, %v295
      %v308 = vadd.f32 %v256, %v296
      %v309 = vadd.f32 %v257, %v297
      %v310 = vadd.f32 %v258, %v298
      %v311 = vadd.f32 %v259, %v299
      %v312 = vadd.f32 %v260, %v300
      %v313 = vadd.f32 %v261, %v301
      %v314 = vadd.f32 %v262, %v302
      %v315 = vadd.f32 %v263, %v303
      %v316 = vadd.f32 %v264, %v304
      %317 = vset.pattern.permute.xlu0 2
      %318 = vperm.xlu0 %317, %v210
      %v319 = vpop.permute.xlu0 %318
      %321 = vset.pattern.permute.xlu0 2
      %322 = vperm.xlu0 %321, %v211
      %v323 = vpop.permute.xlu0 %322
      %325 = vset.pattern.permute.xlu0 2
      %326 = vperm.xlu0 %325, %v212
      %v327 = vpop.permute.xlu0 %326
      %329 = vset.pattern.permute.xlu0 2
      %330 = vperm.xlu0 %329, %v213
      %v331 = vpop.permute.xlu0 %330
      %v333 = vlaneseq
      %v334 = vshrl.u32 %v333, 7
      %v335 = vsub.s32 2, %v334
      %v336 = vrot.slane %v218, %v335
      %v337 = vlaneseq
      %v338 = vshrl.u32 %v337, 7
      %v339 = vsub.s32 2, %v338
      %v340 = vrot.slane %v219, %v339
      %v341 = vlaneseq
      %v342 = vshrl.u32 %v341, 7
      %v343 = vsub.s32 2, %v342
      %v344 = vrot.slane %v220, %v343
      %v345 = vmul.f32 %v319, %v336
      %v346 = vmul.f32 %v319, %v340
      %v347 = vmul.f32 %v319, %v344
      %v348 = vmul.f32 %v323, %v336
      %v349 = vmul.f32 %v323, %v340
      %v350 = vmul.f32 %v323, %v344
      %v351 = vmul.f32 %v327, %v336
      %v352 = vmul.f32 %v327, %v340
      %v353 = vmul.f32 %v327, %v344
      %v354 = vmul.f32 %v331, %v336
      %v355 = vmul.f32 %v331, %v340
      %v356 = vmul.f32 %v331, %v344
      %v357 = vadd.f32 %v305, %v345
      %v358 = vadd.f32 %v306, %v346
      %v359 = vadd.f32 %v307, %v347
      %v360 = vadd.f32 %v308, %v348
      %v361 = vadd.f32 %v309, %v349
      %v362 = vadd.f32 %v310, %v350
      %v363 = vadd.f32 %v311, %v351
      %v364 = vadd.f32 %v312, %v352
      %v365 = vadd.f32 %v313, %v353
      %v366 = vadd.f32 %v314, %v354
      %v367 = vadd.f32 %v315, %v355
      %v368 = vadd.f32 %v316, %v356
      %369 = vset.pattern.permute.xlu0 3
      %370 = vperm.xlu0 %369, %v210
      %v371 = vpop.permute.xlu0 %370
      %373 = vset.pattern.permute.xlu0 3
      %374 = vperm.xlu0 %373, %v211
      %v375 = vpop.permute.xlu0 %374
      %377 = vset.pattern.permute.xlu0 3
      %378 = vperm.xlu0 %377, %v212
      %v379 = vpop.permute.xlu0 %378
      %381 = vset.pattern.permute.xlu0 3
      %382 = vperm.xlu0 %381, %v213
      %v383 = vpop.permute.xlu0 %382
      %v385 = vlaneseq
      %v386 = vshrl.u32 %v385, 7
      %v387 = vsub.s32 3, %v386
      %v388 = vrot.slane %v218, %v387
      %v389 = vlaneseq
      %v390 = vshrl.u32 %v389, 7
      %v391 = vsub.s32 3, %v390
      %v392 = vrot.slane %v219, %v391
      %v393 = vlaneseq
      %v394 = vshrl.u32 %v393, 7
      %v395 = vsub.s32 3, %v394
      %v396 = vrot.slane %v220, %v395
      %v397 = vmul.f32 %v371, %v388
      %v398 = vmul.f32 %v371, %v392
      %v399 = vmul.f32 %v371, %v396
      %v400 = vmul.f32 %v375, %v388
      %v401 = vmul.f32 %v375, %v392
      %v402 = vmul.f32 %v375, %v396
      %v403 = vmul.f32 %v379, %v388
      %v404 = vmul.f32 %v379, %v392
      %v405 = vmul.f32 %v379, %v396
      %v406 = vmul.f32 %v383, %v388
      %v407 = vmul.f32 %v383, %v392
      %v408 = vmul.f32 %v383, %v396
      %v409 = vadd.f32 %v357, %v397
      %v410 = vadd.f32 %v358, %v398
      %v411 = vadd.f32 %v359, %v399
      %v412 = vadd.f32 %v360, %v400
      %v413 = vadd.f32 %v361, %v401
      %v414 = vadd.f32 %v362, %v402
      %v415 = vadd.f32 %v363, %v403
      %v416 = vadd.f32 %v364, %v404
      %v417 = vadd.f32 %v365, %v405
      %v418 = vadd.f32 %v366, %v406
      %v419 = vadd.f32 %v367, %v407
      %v420 = vadd.f32 %v368, %v408
      %421 = vset.pattern.permute.xlu0 4
      %422 = vperm.xlu0 %421, %v210
      %v423 = vpop.permute.xlu0 %422
      %425 = vset.pattern.permute.xlu0 4
      %426 = vperm.xlu0 %425, %v211
      %v427 = vpop.permute.xlu0 %426
      %429 = vset.pattern.permute.xlu0 4
      %430 = vperm.xlu0 %429, %v212
      %v431 = vpop.permute.xlu0 %430
      %433 = vset.pattern.permute.xlu0 4
      %434 = vperm.xlu0 %433, %v213
      %v435 = vpop.permute.xlu0 %434
      %v437 = vlaneseq
      %v438 = vshrl.u32 %v437, 7
      %v439 = vsub.s32 4, %v438
      %v440 = vrot.slane %v218, %v439
      %v441 = vlaneseq
      %v442 = vshrl.u32 %v441, 7
      %v443 = vsub.s32 4, %v442
      %v444 = vrot.slane %v219, %v443
      %v445 = vlaneseq
      %v446 = vshrl.u32 %v445, 7
      %v447 = vsub.s32 4, %v446
      %v448 = vrot.slane %v220, %v447
      %v449 = vmul.f32 %v423, %v440
      %v450 = vmul.f32 %v423, %v444
      %v451 = vmul.f32 %v423, %v448
      %v452 = vmul.f32 %v427, %v440
      %v453 = vmul.f32 %v427, %v444
      %v454 = vmul.f32 %v427, %v448
      %v455 = vmul.f32 %v431, %v440
      %v456 = vmul.f32 %v431, %v444
      %v457 = vmul.f32 %v431, %v448
      %v458 = vmul.f32 %v435, %v440
      %v459 = vmul.f32 %v435, %v444
      %v460 = vmul.f32 %v435, %v448
      %v461 = vadd.f32 %v409, %v449
      %v462 = vadd.f32 %v410, %v450
      %v463 = vadd.f32 %v411, %v451
      %v464 = vadd.f32 %v412, %v452
      %v465 = vadd.f32 %v413, %v453
      %v466 = vadd.f32 %v414, %v454
      %v467 = vadd.f32 %v415, %v455
      %v468 = vadd.f32 %v416, %v456
      %v469 = vadd.f32 %v417, %v457
      %v470 = vadd.f32 %v418, %v458
      %v471 = vadd.f32 %v419, %v459
      %v472 = vadd.f32 %v420, %v460
      %474 = vset.pattern.permute.xlu0 0
      %475 = vperm.xlu0 %474, %v214
      %v476 = vpop.permute.xlu0 %475
      %479 = vset.pattern.permute.xlu0 0
      %480 = vperm.xlu0 %479, %v215
      %v481 = vpop.permute.xlu0 %480
      %484 = vset.pattern.permute.xlu0 0
      %485 = vperm.xlu0 %484, %v216
      %v486 = vpop.permute.xlu0 %485
      %489 = vset.pattern.permute.xlu0 0
      %490 = vperm.xlu0 %489, %v217
      %v491 = vpop.permute.xlu0 %490
      %v493 = vadd.f32 %v461, %v476
      %v494 = vadd.f32 %v462, %v476
      %v495 = vadd.f32 %v463, %v476
      %v496 = vadd.f32 %v464, %v481
      %v497 = vadd.f32 %v465, %v481
      %v498 = vadd.f32 %v466, %v481
      %v499 = vadd.f32 %v467, %v486
      %v500 = vadd.f32 %v468, %v486
      %v501 = vadd.f32 %v469, %v486
      %v502 = vadd.f32 %v470, %v491
      %v503 = vadd.f32 %v471, %v491
      %v504 = vadd.f32 %v472, %v491
      %505 = vst [vmem:[%s208] sm:$0xff] %v493
      %506 = vst [vmem:[%s208 + $0x8] sm:$0xff] %v494
      %vm507 = vcmask 261120
      %508 = vst.msk [vmem:[%s208 + $0x10] sm:$0xff] %vm507, %v495
      %509 = vst [vmem:[%s208 + $0x18] sm:$0xff] %v496
      %510 = vst [vmem:[%s208 + $0x20] sm:$0xff] %v497
      %511 = vst.msk [vmem:[%s208 + $0x28] sm:$0xff] %vm507, %v498
      %512 = vst [vmem:[%s208 + $0x30] sm:$0xff] %v499
      %513 = vst [vmem:[%s208 + $0x38] sm:$0xff] %v500
      %514 = vst.msk [vmem:[%s208 + $0x40] sm:$0xff] %vm507, %v501
      %515 = vst [vmem:[%s208 + $0x48] sm:$0xff] %v502
      %516 = vst [vmem:[%s208 + $0x50] sm:$0xff] %v503
      %517 = vst.msk [vmem:[%s208 + $0x58] sm:$0xff] %vm507, %v504
      %s518 = smul.u32 3, %s19
      %p519 = scmp.lt.s32.totalorder %s18, 1
      %s520 = scalar_select %p519, %s18, 1
      %p521 = scmp.lt.s32.totalorder %s518, 2
      %s522 = scalar_select %p521, %s518, 2
      %s523 = smul.addr %s520, 12
      %s524 = sadd.s32 %s522, %s523
      %s525 = smul.addr %s524, 8
      %s526 = scalar_lea.vmem %s3, %s525
      // Predicated region
      $region33: #{branch_net.1} parent=31 // pred_check
        %p527 = pneg %p116
      $region34: #{branch_net.1} parent=31 // pred_check_branch
        %529 = sbr.rel (%p527) target = $region36
      $region35: #{branch_net.1} parent=31 // pred_region
        %s530 = smul.u32 3, %s19
      $region36: #{branch_net.1} parent=31 // pred_fallthru
        _
    $region32: #{branch_net.1} parent=5 // pred_fallthru
      _
    %p531 = scmp.le.s32.totalorder 2, %s9
    // Predicated region
    $region37: #{branch_net.1} parent=5 // pred_check
      %p532 = pneg %p531
    $region38: #{branch_net.1} parent=5 // pred_check_branch
      %534 = sbr.rel (%p532) target = $region40
    $region39: #{branch_net.1} parent=5 // pred_region
      %s535 = ssub.s32 %s9, 2
      // Predicated region
      $region41: #{branch_net.1} parent=39 // pred_check
        %p536 = pneg %p122
      $region42: #{branch_net.1} parent=39 // pred_check_branch
        %538 = sbr.rel (%p536) target = $region44
      $region43: #{branch_net.1} parent=39 // pred_region
        %s539 = smul.u32 3, %s21
        %p540 = scmp.lt.s32.totalorder %s20, 1
        %s541 = scalar_select %p540, %s20, 1
        %p542 = scmp.lt.s32.totalorder %s539, 2
        %s543 = scalar_select %p542, %s539, 2
        %s544 = smul.addr %s541, 12
        %s545 = sadd.s32 %s543, %s544
        %s546 = smul.addr %s545, 8
        %s547 = scalar_lea.vmem %s3, %s546
      $region44: #{branch_net.1} parent=39 // pred_fallthru
        _
    $region40: #{branch_net.1} parent=5 // pred_fallthru
      _
  $region6: #{branch_net.1} parent=0 // loop_footer
    %s13 = sadd.s32 1, %s9
  $region7: #{branch_net.1} parent=0 // loop_footer_branch
    %8 = sbr.rel target = $region3
  $region8: #{branch_net.1} parent=0 // loop_exit
    _

</llo_original>
